<compile_context>
chip_gen: v5e
topology: v5e:2x2
jax: 0.10.0
libtpu: 0.0.40
codegen_flags: <defaults>
</compile_context>

<pallas_src>
import jax
import jax.numpy as jnp
from jax.experimental import pallas as pl
from jax.experimental.pallas import tpu as pltpu


def _round_up(a, b):
    return ((a + b - 1) // b) * b


def _scale_rows_kernel(x_ref, s_ref, o_ref):
    # x_ref: (r, cw) tile   s_ref: (r, 1) per-row scale (f32)   o_ref: (r, cw)
    # Pure VPU multiply with a free lane broadcast of the scale column;
    # explicit cast back to the output dtype so bf16 I/O lowers cleanly.
    o_ref[...] = (x_ref[...] * s_ref[...]).astype(o_ref.dtype)


def parameter_wrap_forward(x, param):
    """y[n, c, h, w] = x[n, c, h, w] * param[c]  (quant/dequant stubs are identity)."""
    N, C, H, W = x.shape
    assert param.shape == (C,)

    rows, hw = N * C, H * W
    dtype_size = jnp.dtype(x.dtype).itemsize
    # Native sublane multiple for this dtype (f32: 8, bf16: 16, int8/fp8: 32)
    # so blocks land on native tiles without relayouts.
    row_mult = 8 * max(1, 4 // dtype_size)

    # Per-generation pipeline budget: v5e/v6e have 128 MiB VMEM per core,
    # v7x only 64 MiB.  Unknown targets fall back to the conservative choice.
    vmem_limit = 48 << 20
    pipeline_budget = 40 << 20
    try:
        if pltpu.get_tpu_info().vmem_capacity_bytes >= (100 << 20):
            vmem_limit = 96 << 20
            pipeline_budget = 80 << 20
    except Exception:
        pass

    # Lane-dense 2-D view: row = (n, c), lanes = spatial.  Contiguous reshape
    # is free; no padding or output slicing anywhere on the big tensor.
    x2 = x.reshape(rows, hw)
    # Per-row scale column: row index n * C + c -> param[c] (tiny: rows*4 B).
    scale = jnp.tile(param.astype(jnp.float32), N).reshape(rows, 1)

    # Per-row pipeline bytes: double-buffered x in + out, plus the (r, 1)
    # scale column which is lane-padded to 128 in VMEM (512 B / row, f32).
    scale_row_vmem = 2 * 512
    per_row_bytes = 4 * hw * dtype_size + scale_row_vmem

    if row_mult * per_row_bytes <= pipeline_budget:
        # Row-only tiling: biggest row block that fits the pipeline budget.
        # Last block dim = full H*W extent -> exempt from 128 divisibility.
        r = pipeline_budget // per_row_bytes
        if r >= rows:
            r = rows                                   # single full-extent block
        else:
            r = max(row_mult, (r // row_mult) * row_mult)
        cw = hw
    else:
        # Huge-spatial fallback: tile the lane dim too so buffers stay bounded
        # and double buffering survives (especially v7x's 64 MiB VMEM).
        r = row_mult if rows >= row_mult else rows     # full extent if tiny
        cw = (pipeline_budget - r * scale_row_vmem) // (4 * r * dtype_size)
        cw = max(128, (cw // 128) * 128)
        cw = min(cw, _round_up(hw, 128))

    grid = (pl.cdiv(rows, r), pl.cdiv(hw, cw))

    out2 = pl.pallas_call(
        _scale_rows_kernel,
        out_shape=jax.ShapeDtypeStruct((rows, hw), x.dtype),
        grid_spec=pltpu.PrefetchScalarGridSpec(
            num_scalar_prefetch=0,
            grid=grid,
            in_specs=[
                pl.BlockSpec((r, cw), lambda i, j: (i, j)),  # x rows x lane chunk
                pl.BlockSpec((r, 1), lambda i, j: (i, 0)),   # per-row scale column
            ],
            out_specs=pl.BlockSpec((r, cw), lambda i, j: (i, j)),
        ),
        compiler_params=pltpu.CompilerParams(
            dimension_semantics=("parallel", "parallel"),  # rows split over TCs
            vmem_limit_bytes=vmem_limit,
        ),
        cost_estimate=pl.CostEstimate(
            flops=rows * hw,
            bytes_accessed=2 * rows * hw * dtype_size + rows * 4,
            transcendentals=0,
        ),
    )(x2, scale)

    return out2.reshape(N, C, H, W)


if __name__ == "__main__":
    key = jax.random.PRNGKey(0)
    kx, kp = jax.random.split(key)

    # Small NCHW input; C = 2 to match the module's Parameter(torch.ones(2)).
    N, C, H, W = 2, 2, 16, 16
    x = jax.random.normal(kx, (N, C, H, W), dtype=jnp.float32)

    # Deterministic parameter matching __init__ (ones(2)), perturbed so the
    # per-channel scale path is actually exercised.
    param = jnp.ones((C,), dtype=jnp.float32)
    param = param + 0.5 * jax.random.normal(kp, (C,), dtype=jnp.float32)

    # float32 path
    y = parameter_wrap_forward(x, param)
    y = jax.block_until_ready(y)
    y_ref = x * param.reshape(1, C, 1, 1)
    assert y.shape == x.shape and y.dtype == x.dtype
    assert jnp.allclose(y, y_ref, atol=1e-6, rtol=1e-6)

    # bfloat16 path (exercises the explicit astype on the store and row_mult=16)
    x_bf = x.astype(jnp.bfloat16)
    y_bf = jax.block_until_ready(parameter_wrap_forward(x_bf, param))
    y_bf_ref = (x_bf.astype(jnp.float32) * param.reshape(1, C, 1, 1)).astype(jnp.bfloat16)
    assert y_bf.dtype == jnp.bfloat16
    assert jnp.allclose(y_bf.astype(jnp.float32), y_bf_ref.astype(jnp.float32),
                        atol=1e-2, rtol=1e-2)

    print("KERNEL_OK")
</pallas_src>

<mosaic_0001>
module attributes {stable_mosaic.version = 11 : i64} {
  func.func @_scale_rows_kernel(%arg0: i32, %arg1: i32, %arg2: memref<4x256xf32, #tpu.memory_space<vmem>>, %arg3: memref<4x1xf32, #tpu.memory_space<vmem>>, %arg4: memref<4x256xf32, #tpu.memory_space<vmem>>) attributes {dimension_semantics = [#tpu.dimension_semantics<parallel>, #tpu.dimension_semantics<parallel>], iteration_bounds = array<i64: 1, 1>, scalar_prefetch = 0 : i64, scratch_operands = 0 : i64, tpu.core_type = #tpu.core_type<tc>, window_params = [{transform_indices = @transform_0, window_bounds = array<i64: 4, 256>}, {transform_indices = @transform_1, window_bounds = array<i64: 4, 1>}, {transform_indices = @transform_2, window_bounds = array<i64: 4, 256>}]} {
    %c0 = arith.constant 0 : index
    %c0_0 = arith.constant 0 : index
    %0 = vector.load %arg2[%c0, %c0_0] : memref<4x256xf32, #tpu.memory_space<vmem>>, vector<4x256xf32>
    %c0_1 = arith.constant 0 : index
    %c0_2 = arith.constant 0 : index
    %1 = vector.load %arg3[%c0_1, %c0_2] : memref<4x1xf32, #tpu.memory_space<vmem>>, vector<4x1xf32>
    %2 = vector.broadcast %1 : vector<4x1xf32> to vector<4x256xf32>
    %3 = arith.mulf %0, %2 : vector<4x256xf32>
    %c0_3 = arith.constant 0 : index
    %c0_4 = arith.constant 0 : index
    %4 = vector.load %arg4[%c0_3, %c0_4] : memref<4x256xf32, #tpu.memory_space<vmem>>, vector<4x256xf32>
    tpu.vector_store %arg4[%c0_3, %c0_4], %3 {strides = array<i32>} : memref<4x256xf32, #tpu.memory_space<vmem>>, vector<4x256xf32>,
    return
  }
  func.func @transform_0(%arg0: i32, %arg1: i32) -> (i32, i32) {
    %c0_i32 = arith.constant 0 : i32
    return %arg0, %arg1 : i32, i32
  }
  func.func @transform_1(%arg0: i32, %arg1: i32) -> (i32, i32) {
    %c0_i32 = arith.constant 0 : i32
    %c0_i32_0 = arith.constant 0 : i32
    return %arg0, %c0_i32 : i32, i32
  }
  func.func @transform_2(%arg0: i32, %arg1: i32) -> (i32, i32) {
    %c0_i32 = arith.constant 0 : i32
    return %arg0, %arg1 : i32, i32
  }
}

</mosaic_0001>

<llo_original>
// kernel: tpu_custom_call.1
$region0: #{tpu_custom_call.1}
  #allocation0 [shape = 'u32[]', space=smem, size = 0x4, offset = 0x4, fixed_abs, tag = 'smem constant byte address 0x4 - core index']
  #allocation1 [shape = 'u32[72,128]{1,0:T(1,128)}', space=vmem, size = 0x9000, scoped, tag = 'internal scratch']
  %s0 = inlined_call_operand.hbm [shape: f32[4,256], index: 0, kind: input, shape index: {}]
  %s1 = inlined_call_operand.vmem [shape: f32[4,1], index: 1, kind: input, shape index: {}]
  %s2 = inlined_call_operand.hbm [shape: f32[4,256], index: 2, kind: output, shape index: {}]
  %s3 = sld [smem:[#allocation0]]
  $region22: #{tpu_custom_call.1} parent=0
    _
  %s5 = ssub.s32 1, %s3
  %s6 = scalar_select 0, %s5, %s3
  $region1: #{tpu_custom_call.1} parent=0
    #allocation2 [shape = 'u8[4096]{0}', space=vmem, size = 0x1000, scoped, tag = 'input window, operand 0, single buffered']
    #allocation3 [shape = 's32[1]{0}', space=sflag, size = 0x4, scoped, tag = 'scoped memory for tpu_custom_call.1']
    #allocation4 [shape = 's32[1]{0}', space=sflag, size = 0x4, scoped, tag = 'scoped memory for tpu_custom_call.1']
    #allocation5 [shape = 'u8[4096]{0}', space=vmem, size = 0x1000, scoped, tag = 'output window, operand 0, single buffered']
    %7 = vsyncpa [#allocation3], 0
    %8 = vsyncpa [#allocation4], 0
    // Predicated region
    $region2: #{tpu_custom_call.1} parent=1 // pred_check
      _
    $region3: #{tpu_custom_call.1} parent=1 // pred_check_branch
      %10 = sbr.rel (0) target = $region5
    $region4: #{tpu_custom_call.1} parent=1 // pred_region
      %12 = vsyncadd [#allocation3], 0
      %s14 = sshll.u32 %s0, 4
      %s15 = int_to_ptr.hbm [resolvable:$true] %s14
      %s16 = sshll.u32 [#allocation2], 4
      %s17 = int_to_ptr.vmem [resolvable:$true] %s16
      %19 = dma.hbm_to_vmem [thread:$0]  %s15, 128, %s17, [#allocation3]
    $region5: #{tpu_custom_call.1} parent=1 // pred_fallthru
      _
    // Predicated region
    $region6: #{tpu_custom_call.1} parent=1 // pred_check
      _
    $region7: #{tpu_custom_call.1} parent=1 // pred_check_branch
      %21 = sbr.rel (0) target = $region9
    $region8: #{tpu_custom_call.1} parent=1 // pred_region
      _
    $region9: #{tpu_custom_call.1} parent=1 // pred_fallthru
      _
    // Predicated region
    $region10: #{tpu_custom_call.1} parent=1 // pred_check
      _
    $region11: #{tpu_custom_call.1} parent=1 // pred_check_branch
      %23 = sbr.rel (0) target = $region13
    $region12: #{tpu_custom_call.1} parent=1 // pred_region
      %25 = dma.done [#allocation3], 128
    $region13: #{tpu_custom_call.1} parent=1 // pred_fallthru
      _
    %v26 = vld [vmem:[#allocation2] sm:$0xff]
    %v27 = vld [vmem:[%s1] sm:$0xf]
    %29 = vset.pattern.permute.xlu0 0
    %30 = vperm.xlu0 %29, %v27
    %v31 = vpop.permute.xlu0 %30
    %v33 = vunpack.c.l.s4 839922192
    %v34 = vunpack.c.0.s8 %v33
    %v35 = vperm.slane %v31, %v34
    %v37 = vmul.f32 %v26, %v35
    %38 = vst [vmem:[#allocation5] sm:$0xff] %v37
    // Predicated region
    $region14: #{tpu_custom_call.1} parent=1 // pred_check
      _
    $region15: #{tpu_custom_call.1} parent=1 // pred_check_branch
      %40 = sbr.rel (0) target = $region17
    $region16: #{tpu_custom_call.1} parent=1 // pred_region
      %42 = vsyncadd [#allocation4], 0
      %s44 = sshll.u32 [#allocation5], 4
      %s45 = int_to_ptr.vmem [resolvable:$true] %s44
      %s46 = sshll.u32 %s2, 4
      %s47 = int_to_ptr.hbm [resolvable:$true] %s46
      %49 = dma.vmem_to_hbm [thread:$0]  %s45, 128, %s47, [#allocation4]
    $region17: #{tpu_custom_call.1} parent=1 // pred_fallthru
      _
    // Predicated region
    $region18: #{tpu_custom_call.1} parent=1 // pred_check
      _
    $region19: #{tpu_custom_call.1} parent=1 // pred_check_branch
      %51 = sbr.rel (0) target = $region21
    $region20: #{tpu_custom_call.1} parent=1 // pred_region
      %53 = dma.done [#allocation4], 128
    $region21: #{tpu_custom_call.1} parent=1 // pred_fallthru
      _
    %54 = vsyncpa [#allocation3], 1
    %55 = vsyncpa [#allocation4], 1

</llo_original>
